<compile_context>
chip_gen: v6e
topology: v6e:2x2x1
jax: 0.10.0
libtpu: 0.0.40
codegen_flags: <defaults>
</compile_context>

<pallas_src>
import jax
import jax.numpy as jnp
from jax.experimental import pallas as pl
from jax.experimental.pallas import tpu as pltpu


def _round_up(x, m):
    return (x + m - 1) // m * m


# ----------------------------------------------------------------------------
# Fused kernels
# ----------------------------------------------------------------------------
def _fused_precomposed_kernel(x_ref, w_ref, m_ref, wc_ref, bc_ref, o_ref):
    # x_ref : (TM, Fp) f32   flattened NCHW images (batch tile)
    # w_ref : (1,  Fp) f32   reprogramming pattern W (flattened, zero-padded)
    # m_ref : (1,  Fp) f32   mask M (flattened, zero-padded)
    # wc_ref: (Fp, N2p) bf16  Wc = w1 @ w2 (precomposed; affine stand-in only)
    # bc_ref: (1,  N2p) f32   bc = b1 @ w2 + b2
    # o_ref : (TM, N2p) f32
    p = jnp.tanh(w_ref[...] * m_ref[...])                  # (1, Fp)  VPU/EUP, f32
    x_adv = x_ref[...] + p                                 # broadcast over batch rows
    y = jnp.dot(x_adv.astype(jnp.bfloat16), wc_ref[...],
                preferred_element_type=jnp.float32)        # MXU bf16 -> f32 acc
    o_ref[...] = (y + bc_ref[...]).astype(o_ref.dtype)


def _fused_two_gemm_kernel(x_ref, w_ref, m_ref, w1_ref, w2_ref, bc_ref, o_ref):
    # Fallback path that survives a real (nonlinear) backbone replacing w1.
    p = jnp.tanh(w_ref[...] * m_ref[...])
    x_adv = x_ref[...] + p                                 # (TM, Fp)
    h = jnp.dot(x_adv.astype(jnp.bfloat16), w1_ref[...],
                preferred_element_type=jnp.float32)        # (TM, N1p)
    # TODO(synk): a real backbone's nonlinearity would go here; b1 is then NOT
    # foldable into bc and must be re-added before it.
    y = jnp.dot(h.astype(jnp.bfloat16), w2_ref[...],
                preferred_element_type=jnp.float32)        # (TM, N2p)
    o_ref[...] = (y + bc_ref[...]).astype(o_ref.dtype)


# ----------------------------------------------------------------------------
# Module wrapper
# ----------------------------------------------------------------------------
class ReProgrammingNetworkPallas:
    def __init__(self, input_size=16, patch_H_size=12, patch_W_size=12,
                 channel_out=3, key=None, precompose_linears=True,
                 batch_tile=256):
        if key is None:
            key = jax.random.PRNGKey(0)
        k_w, k_w1, k_b1, k_w2, k_b2 = jax.random.split(key, 5)

        self.channel_out = channel_out
        self.input_size = input_size
        self.precompose_linears = precompose_linears
        # TM cap: 256 keeps x-tile + implicit h intermediate well under v5e's
        # 16 MiB default scoped VMEM (also fine for v6e/v7x).
        self.batch_tile = batch_tile

        # ---- mask M: ones, zero over the centred patch (same index math as PyTorch)
        H_start = input_size // 2 - patch_H_size // 2
        H_end = H_start + patch_H_size
        W_start = input_size // 2 - patch_W_size // 2
        W_end = W_start + patch_W_size
        M = jnp.ones((channel_out, input_size, input_size), jnp.float32)
        M = M.at[:, H_start:H_end, W_start:W_end].set(0.0)
        self.M = M

        # ---- trainable reprogramming pattern W ~ randn(C, H, W)
        self.W = jax.random.normal(
            k_w, (channel_out, input_size, input_size), jnp.float32)

        # ---- backbone stand-in: Linear(C*H*W -> 1000); head: Linear(1000 -> 10)
        feat = channel_out * input_size * input_size
        self.F = feat
        self.N1, self.N2 = 1000, 10
        self.w1 = 0.02 * jax.random.normal(k_w1, (feat, self.N1), jnp.float32)
        self.b1 = 0.02 * jax.random.normal(k_b1, (1, self.N1), jnp.float32)
        self.w2 = 0.02 * jax.random.normal(k_w2, (self.N1, self.N2), jnp.float32)
        self.b2 = 0.02 * jax.random.normal(k_b2, (1, self.N2), jnp.float32)

        # ---- padded / lane-dense kernel operands
        self.Fp = _round_up(feat, 128)          # 768  -> 768 (already lane aligned)
        self.N1p = _round_up(self.N1, 128)      # 1000 -> 1024
        self.N2p = _round_up(self.N2, 128)      # 10   -> 128 (unmasked vst on output)

        self.w_flat = (jnp.zeros((1, self.Fp), jnp.float32)
                       .at[:, :feat].set(self.W.reshape(1, feat)))
        self.m_flat = (jnp.zeros((1, self.Fp), jnp.float32)
                       .at[:, :feat].set(self.M.reshape(1, feat)))

        # b1 folded into the head bias (valid only while the backbone stand-in is affine)
        bc = self.b1 @ self.w2 + self.b2                        # (1, 10) f32
        self.bc_p = (jnp.zeros((1, self.N2p), jnp.float32)
                     .at[:, :self.N2].set(bc))

        # Precomposed weight Wc = w1 @ w2 (f32 compose, streamed bf16): ~0.2 MiB/call
        wc = self.w1 @ self.w2                                  # (feat, 10) f32
        self.wc_p = (jnp.zeros((self.Fp, self.N2p), jnp.bfloat16)
                     .at[:feat, :self.N2].set(wc.astype(jnp.bfloat16)))

        # Two-GEMM fallback operands: both weights streamed bf16 (f32 MXU acc).
        self.w1_p = (jnp.zeros((self.Fp, self.N1p), jnp.bfloat16)
                     .at[:feat, :self.N1].set(self.w1.astype(jnp.bfloat16)))
        self.w2_p = (jnp.zeros((self.N1p, self.N2p), jnp.bfloat16)
                     .at[:self.N1, :self.N2].set(self.w2.astype(jnp.bfloat16)))

    def __call__(self, X):
        # X: (B, C, H, W) NCHW, float32
        B, C, H, Wd = X.shape
        F = C * H * Wd
        assert F == self.F, "input shape inconsistent with module configuration"

        x2d = X.reshape(B, F)
        if self.Fp != F:                         # lane-align feature axis if needed
            x2d = jnp.pad(x2d, ((0, 0), (0, self.Fp - F)))

        # Batch handling: small batches run as a single full-array block (no pad,
        # no wasted padded rows); larger batches are tiled so weights are fetched
        # once and stay VMEM-resident while x/out tiles stream (double-buffered).
        TM = B if B <= self.batch_tile else self.batch_tile
        grid = (pl.cdiv(B, TM),)

        x_spec = pl.BlockSpec((TM, self.Fp), lambda i: (i, 0))
        out_spec = pl.BlockSpec((TM, self.N2p), lambda i: (i, 0))
        params = pltpu.CompilerParams(dimension_semantics=("parallel",))

        if self.precompose_linears:
            out = pl.pallas_call(
                _fused_precomposed_kernel,
                out_shape=jax.ShapeDtypeStruct((B, self.N2p), jnp.float32),
                grid=grid,
                in_specs=[
                    x_spec,
                    pl.BlockSpec((1, self.Fp), lambda i: (0, 0)),
                    pl.BlockSpec((1, self.Fp), lambda i: (0, 0)),
                    pl.BlockSpec((self.Fp, self.N2p), lambda i: (0, 0)),
                    pl.BlockSpec((1, self.N2p), lambda i: (0, 0)),
                ],
                out_specs=out_spec,
                compiler_params=params,
            )(x2d, self.w_flat, self.m_flat, self.wc_p, self.bc_p)
        else:
            out = pl.pallas_call(
                _fused_two_gemm_kernel,
                out_shape=jax.ShapeDtypeStruct((B, self.N2p), jnp.float32),
                grid=grid,
                in_specs=[
                    x_spec,
                    pl.BlockSpec((1, self.Fp), lambda i: (0, 0)),
                    pl.BlockSpec((1, self.Fp), lambda i: (0, 0)),
                    pl.BlockSpec((self.Fp, self.N1p), lambda i: (0, 0)),
                    pl.BlockSpec((self.N1p, self.N2p), lambda i: (0, 0)),
                    pl.BlockSpec((1, self.N2p), lambda i: (0, 0)),
                ],
                out_specs=out_spec,
                compiler_params=params,
            )(x2d, self.w_flat, self.m_flat, self.w1_p, self.w2_p, self.bc_p)

        return out[:, :self.N2]                               # (B, 10)


if __name__ == "__main__":
    key = jax.random.PRNGKey(0)
    k_model, k_x = jax.random.split(key)

    B, C, H, W = 2, 3, 16, 16
    model = ReProgrammingNetworkPallas(
        input_size=H, patch_H_size=12, patch_W_size=12, channel_out=C,
        key=k_model, precompose_linears=True)

    x = jax.random.normal(k_x, (B, C, H, W), jnp.float32)

    # default (precomposed single-GEMM) path
    y = jax.block_until_ready(model(x))
    assert y.shape == (B, 10) and y.dtype == jnp.float32

    # two-GEMM fallback path (the one that survives a real nonlinear backbone)
    model.precompose_linears = False
    y2 = jax.block_until_ready(model(x))
    assert y2.shape == (B, 10) and y2.dtype == jnp.float32
    model.precompose_linears = True

    # ---- pure-f32 reference of the module forward (bf16 streaming introduces
    # ~1e-3 abs error vs. this reference; documented fidelity, within tolerance).
    p_ref = jnp.tanh(model.W * model.M)
    x_adv_ref = (x + p_ref[None]).reshape(B, -1)
    h_ref = x_adv_ref @ model.w1 + model.b1
    y_ref = h_ref @ model.w2 + model.b2

    err1 = float(jnp.max(jnp.abs(y - y_ref)))
    err2 = float(jnp.max(jnp.abs(y2 - y_ref)))
    assert jnp.allclose(y, y_ref, atol=2e-2, rtol=2e-2), err1
    assert jnp.allclose(y2, y_ref, atol=2e-2, rtol=2e-2), err2

    print("KERNEL_OK")
</pallas_src>

<mosaic_0001>
module attributes {stable_mosaic.version = 11 : i64} {
  func.func @_fused_precomposed_kernel(%arg0: i32, %arg1: memref<2x768xf32, #tpu.memory_space<vmem>>, %arg2: memref<1x768xf32, #tpu.memory_space<vmem>>, %arg3: memref<1x768xf32, #tpu.memory_space<vmem>>, %arg4: memref<768x128xbf16, #tpu.memory_space<vmem>>, %arg5: memref<1x128xf32, #tpu.memory_space<vmem>>, %arg6: memref<2x128xf32, #tpu.memory_space<vmem>>) attributes {dimension_semantics = [#tpu.dimension_semantics<parallel>], iteration_bounds = array<i64: 1>, scalar_prefetch = 0 : i64, scratch_operands = 0 : i64, tpu.core_type = #tpu.core_type<tc>, window_params = [{transform_indices = @transform_0, window_bounds = array<i64: 2, 768>}, {pipeline_mode = #tpu.pipeline_mode<synchronous>, transform_indices = @transform_1, window_bounds = array<i64: 1, 768>}, {pipeline_mode = #tpu.pipeline_mode<synchronous>, transform_indices = @transform_2, window_bounds = array<i64: 1, 768>}, {pipeline_mode = #tpu.pipeline_mode<synchronous>, transform_indices = @transform_3, window_bounds = array<i64: 768, 128>}, {pipeline_mode = #tpu.pipeline_mode<synchronous>, transform_indices = @transform_4, window_bounds = array<i64: 1, 128>}, {transform_indices = @transform_5, window_bounds = array<i64: 2, 128>}]} {
    %c0 = arith.constant 0 : index
    %c0_0 = arith.constant 0 : index
    %0 = vector.load %arg2[%c0, %c0_0] : memref<1x768xf32, #tpu.memory_space<vmem>>, vector<1x768xf32>
    %c0_1 = arith.constant 0 : index
    %c0_2 = arith.constant 0 : index
    %1 = vector.load %arg3[%c0_1, %c0_2] : memref<1x768xf32, #tpu.memory_space<vmem>>, vector<1x768xf32>
    %2 = arith.mulf %0, %1 : vector<1x768xf32>
    %3 = math.tanh %2 : vector<1x768xf32>
    %c0_3 = arith.constant 0 : index
    %c0_4 = arith.constant 0 : index
    %4 = vector.load %arg1[%c0_3, %c0_4] : memref<2x768xf32, #tpu.memory_space<vmem>>, vector<2x768xf32>
    %5 = vector.broadcast %3 : vector<1x768xf32> to vector<2x768xf32>
    %6 = arith.addf %4, %5 : vector<2x768xf32>
    %7 = arith.truncf %6 : vector<2x768xf32> to vector<2x768xbf16>
    %c0_5 = arith.constant 0 : index
    %c0_6 = arith.constant 0 : index
    %8 = vector.load %arg4[%c0_5, %c0_6] : memref<768x128xbf16, #tpu.memory_space<vmem>>, vector<768x128xbf16>
    %cst = arith.constant dense<0.000000e+00> : vector<2x128xf32>
    %9 = tpu.matmul %7, %8, %cst {dimension_numbers = #tpu.dot_dimension_numbers<[1], [0], [0], [1], [0, 0, 1, 1], [], []>} : vector<2x768xbf16>, vector<768x128xbf16>, vector<2x128xf32> -> vector<2x128xf32>
    %c0_7 = arith.constant 0 : index
    %c0_8 = arith.constant 0 : index
    %10 = vector.load %arg5[%c0_7, %c0_8] : memref<1x128xf32, #tpu.memory_space<vmem>>, vector<1x128xf32>
    %11 = vector.broadcast %10 : vector<1x128xf32> to vector<2x128xf32>
    %12 = arith.addf %9, %11 : vector<2x128xf32>
    %c0_9 = arith.constant 0 : index
    %c0_10 = arith.constant 0 : index
    %13 = vector.load %arg6[%c0_9, %c0_10] : memref<2x128xf32, #tpu.memory_space<vmem>>, vector<2x128xf32>
    tpu.vector_store %arg6[%c0_9, %c0_10], %12 {strides = array<i32>} : memref<2x128xf32, #tpu.memory_space<vmem>>, vector<2x128xf32>,
    return
  }
  func.func @transform_0(%arg0: i32) -> (i32, i32) {
    %c0_i32 = arith.constant 0 : i32
    %c0_i32_0 = arith.constant 0 : i32
    return %arg0, %c0_i32 : i32, i32
  }
  func.func @transform_1(%arg0: i32) -> (i32, i32) {
    %c0_i32 = arith.constant 0 : i32
    %c0_i32_0 = arith.constant 0 : i32
    %c0_i32_1 = arith.constant 0 : i32
    return %c0_i32, %c0_i32_0 : i32, i32
  }
  func.func @transform_2(%arg0: i32) -> (i32, i32) {
    %c0_i32 = arith.constant 0 : i32
    %c0_i32_0 = arith.constant 0 : i32
    %c0_i32_1 = arith.constant 0 : i32
    return %c0_i32, %c0_i32_0 : i32, i32
  }
  func.func @transform_3(%arg0: i32) -> (i32, i32) {
    %c0_i32 = arith.constant 0 : i32
    %c0_i32_0 = arith.constant 0 : i32
    %c0_i32_1 = arith.constant 0 : i32
    return %c0_i32, %c0_i32_0 : i32, i32
  }
  func.func @transform_4(%arg0: i32) -> (i32, i32) {
    %c0_i32 = arith.constant 0 : i32
    %c0_i32_0 = arith.constant 0 : i32
    %c0_i32_1 = arith.constant 0 : i32
    return %c0_i32, %c0_i32_0 : i32, i32
  }
  func.func @transform_5(%arg0: i32) -> (i32, i32) {
    %c0_i32 = arith.constant 0 : i32
    %c0_i32_0 = arith.constant 0 : i32
    return %arg0, %c0_i32 : i32, i32
  }
}

</mosaic_0001>

<llo_original>
// kernel: tpu_custom_call.1
$region0: #{tpu_custom_call.1}
  #allocation0 [shape = 'u32[]', space=smem, size = 0x4, offset = 0x4, fixed_abs, tag = 'smem constant byte address 0x4 - core index']
  #allocation1 [shape = 'u32[144,128]{1,0:T(1,128)}', space=vmem, size = 0x12000, scoped, tag = 'internal scratch']
  %s0 = inlined_call_operand.hbm [shape: f32[2,768], index: 0, kind: input, shape index: {}]
  %s1 = inlined_call_operand.hbm [shape: f32[1,768], index: 1, kind: input, shape index: {}]
  %s2 = inlined_call_operand.hbm [shape: f32[1,768], index: 2, kind: input, shape index: {}]
  %s3 = inlined_call_operand.hbm [shape: bf16[768,128], index: 3, kind: input, shape index: {}]
  %s4 = inlined_call_operand.vmem [shape: f32[1,128], index: 4, kind: input, shape index: {}]
  %s5 = inlined_call_operand.hbm [shape: f32[2,128], index: 5, kind: output, shape index: {}]
  %s6 = sld [smem:[#allocation0]]
  $region46: #{tpu_custom_call.1} parent=0
    _
  %s8 = ssub.s32 1, %s6
  %s9 = scalar_select 0, %s8, %s6
  $region1: #{tpu_custom_call.1} parent=0
    #allocation2 [shape = 'u8[6144]{0}', space=vmem, size = 0x1800, scoped, tag = 'input window, operand 0, single buffered']
    #allocation3 [shape = 's32[1]{0}', space=sflag, size = 0x4, scoped, tag = 'scoped memory for tpu_custom_call.1']
    #allocation4 [shape = 's32[1]{0}', space=sflag, size = 0x4, scoped, tag = 'scoped memory for tpu_custom_call.1']
    #allocation5 [shape = 'u8[3072]{0}', space=vmem, size = 0xc00, scoped, tag = 'input window, operand 1, single buffered']
    #allocation6 [shape = 's32[1]{0}', space=sflag, size = 0x4, scoped, tag = 'scoped memory for tpu_custom_call.1']
    #allocation7 [shape = 'u8[3072]{0}', space=vmem, size = 0xc00, scoped, tag = 'input window, operand 2, single buffered']
    #allocation8 [shape = 'u8[196608]{0}', space=vmem, size = 0x30000, scoped, tag = 'input window, operand 3, single buffered']
    #allocation9 [shape = 's32[1]{0}', space=sflag, size = 0x4, scoped, tag = 'scoped memory for tpu_custom_call.1']
    #allocation10 [shape = 'u8[1024]{0}', space=vmem, size = 0x400, scoped, tag = 'output window, operand 0, single buffered']
    %10 = vsyncpa [#allocation3], 0
    %11 = vsyncpa [#allocation6], 0
    %12 = vsyncpa [#allocation9], 0
    %13 = vsyncpa [#allocation4], 0
    // Predicated region
    $region2: #{tpu_custom_call.1} parent=1 // pred_check
      _
    $region3: #{tpu_custom_call.1} parent=1 // pred_check_branch
      %15 = sbr.rel (0) target = $region5
    $region4: #{tpu_custom_call.1} parent=1 // pred_region
      %s17 = ssub.s32 192, 192
      %18 = vsyncadd [#allocation3], %s17
      %s20 = sshll.u32 [#allocation2], 4
      %s21 = int_to_ptr.vmem [resolvable:$true] %s20
      %23 = dma.hbm_to_vmem [thread:$0]  %s0, 192, %s21, [#allocation3]
    $region5: #{tpu_custom_call.1} parent=1 // pred_fallthru
      _
    // Predicated region
    $region6: #{tpu_custom_call.1} parent=1 // pred_check
      _
    $region7: #{tpu_custom_call.1} parent=1 // pred_check_branch
      %25 = sbr.rel (0) target = $region9
    $region8: #{tpu_custom_call.1} parent=1 // pred_region
      %s27 = ssub.s32 96, 96
      %28 = vsyncadd [#allocation6], %s27
      %s30 = sshll.u32 [#allocation5], 4
      %s31 = int_to_ptr.vmem [resolvable:$true] %s30
      %33 = dma.hbm_to_vmem [thread:$0]  %s1, 96, %s31, [#allocation6]
    $region9: #{tpu_custom_call.1} parent=1 // pred_fallthru
      _
    // Predicated region
    $region10: #{tpu_custom_call.1} parent=1 // pred_check
      _
    $region11: #{tpu_custom_call.1} parent=1 // pred_check_branch
      %35 = sbr.rel (0) target = $region13
    $region12: #{tpu_custom_call.1} parent=1 // pred_region
      %s37 = ssub.s32 96, 96
      %38 = vsyncadd [#allocation6], %s37
      %s40 = sshll.u32 [#allocation7], 4
      %s41 = int_to_ptr.vmem [resolvable:$true] %s40
      %43 = dma.hbm_to_vmem [thread:$0]  %s2, 96, %s41, [#allocation6]
    $region13: #{tpu_custom_call.1} parent=1 // pred_fallthru
      _
    // Predicated region
    $region14: #{tpu_custom_call.1} parent=1 // pred_check
      _
    $region15: #{tpu_custom_call.1} parent=1 // pred_check_branch
      %45 = sbr.rel (0) target = $region17
    $region16: #{tpu_custom_call.1} parent=1 // pred_region
      %s47 = ssub.s32 6144, 6144
      %48 = vsyncadd [#allocation9], %s47
      %s49 = sshll.u32 [#allocation8], 4
      %s50 = int_to_ptr.vmem [resolvable:$true] %s49
      %55 = dma.hbm_to_vmem [thread:$0]  %s3, 6144, %s50, [#allocation9], 64, 64, 4
    $region17: #{tpu_custom_call.1} parent=1 // pred_fallthru
      _
    // Predicated region
    $region18: #{tpu_custom_call.1} parent=1 // pred_check
      _
    $region19: #{tpu_custom_call.1} parent=1 // pred_check_branch
      %57 = sbr.rel (0) target = $region21
    $region20: #{tpu_custom_call.1} parent=1 // pred_region
      _
    $region21: #{tpu_custom_call.1} parent=1 // pred_fallthru
      _
    // Predicated region
    $region22: #{tpu_custom_call.1} parent=1 // pred_check
      _
    $region23: #{tpu_custom_call.1} parent=1 // pred_check_branch
      %59 = sbr.rel (0) target = $region25
    $region24: #{tpu_custom_call.1} parent=1 // pred_region
      %60 = dma.done [#allocation3], 192
    $region25: #{tpu_custom_call.1} parent=1 // pred_fallthru
      _
    // Predicated region
    $region26: #{tpu_custom_call.1} parent=1 // pred_check
      _
    $region27: #{tpu_custom_call.1} parent=1 // pred_check_branch
      %62 = sbr.rel (0) target = $region29
    $region28: #{tpu_custom_call.1} parent=1 // pred_region
      %63 = dma.done [#allocation6], 96
    $region29: #{tpu_custom_call.1} parent=1 // pred_fallthru
      _
    // Predicated region
    $region30: #{tpu_custom_call.1} parent=1 // pred_check
      _
    $region31: #{tpu_custom_call.1} parent=1 // pred_check_branch
      %65 = sbr.rel (0) target = $region33
    $region32: #{tpu_custom_call.1} parent=1 // pred_region
      %66 = dma.done [#allocation6], 96
    $region33: #{tpu_custom_call.1} parent=1 // pred_fallthru
      _
    // Predicated region
    $region34: #{tpu_custom_call.1} parent=1 // pred_check
      _
    $region35: #{tpu_custom_call.1} parent=1 // pred_check_branch
      %68 = sbr.rel (0) target = $region37
    $region36: #{tpu_custom_call.1} parent=1 // pred_region
      %69 = dma.done [#allocation9], 6144
    $region37: #{tpu_custom_call.1} parent=1 // pred_fallthru
      _
    %v71 = vld [vmem:[#allocation5] sm:$0x3f]
    %v72 = vld [vmem:[#allocation7] sm:$0x3f]
    %v73 = vmul.f32 %v71, %v72
    %v74 = vtanh.pop %v73
    %v75 = vld [vmem:[#allocation2] sm:$0xff]
    %v76 = vld [vmem:[#allocation2 + $0x8] sm:$0xf]
    %v78 = vlaneseq
    %v79 = vshrl.u32 %v78, 7
    %v80 = vsub.s32 0, %v79
    %v81 = vrot.slane %v74, %v80
    %v82 = vlaneseq
    %v83 = vshrl.u32 %v82, 7
    %v84 = vsub.s32 1, %v83
    %v85 = vrot.slane %v74, %v84
    %v86 = vlaneseq
    %v87 = vshrl.u32 %v86, 7
    %v88 = vsub.s32 2, %v87
    %v89 = vrot.slane %v74, %v88
    %v90 = vlaneseq
    %v91 = vshrl.u32 %v90, 7
    %v92 = vsub.s32 3, %v91
    %v93 = vrot.slane %v74, %v92
    %v94 = vlaneseq
    %v95 = vshrl.u32 %v94, 7
    %v96 = vsub.s32 4, %v95
    %v97 = vrot.slane %v74, %v96
    %v98 = vlaneseq
    %v99 = vshrl.u32 %v98, 7
    %v100 = vsub.s32 5, %v99
    %v101 = vrot.slane %v74, %v100
    %v102 = vcombine.low %v81, %v85
    %v103 = vcombine.low %v89, %v93
    %v105 = vunpack.c.l.s4 1983009808
    %v106 = vunpack.c.0.s8 %v105
    %v107 = vlaneseq
    %v108 = vshrl.u32 %v107, 7
    %v109 = vsub.s32 %v106, %v108
    %v110 = vrot.slane %v102, %v109
    %v112 = vunpack.c.l.s4 1983009808
    %v113 = vunpack.c.0.s8 %v112
    %v114 = vlaneseq
    %v115 = vshrl.u32 %v114, 7
    %v116 = vsub.s32 %v113, %v115
    %v117 = vrot.slane %v103, %v116
    %v118 = vcombine.low %v110, %v117
    %v119 = vcombine.low %v97, %v101
    %v121 = vunpack.c.l.s4 1983009808
    %v122 = vunpack.c.0.s8 %v121
    %v123 = vlaneseq
    %v124 = vshrl.u32 %v123, 7
    %v125 = vsub.s32 %v122, %v124
    %v126 = vrot.slane %v119, %v125
    %v129 = vadd.f32 %v75, %v118
    %v130 = vadd.f32 %v76, %v126
    %v133 = vcombine.high %v129, %v129
    %v135 = vunpack.c.l.s4 1983009808
    %v136 = vunpack.c.0.s8 %v135
    %v137 = vlaneseq
    %v138 = vshrl.u32 %v137, 7
    %v139 = vsub.s32 %v136, %v138
    %v140 = vrot.slane %v129, %v139
    %v142 = vunpack.c.l.s4 1983009808
    %v143 = vunpack.c.0.s8 %v142
    %v144 = vlaneseq
    %v145 = vshrl.u32 %v144, 7
    %v146 = vsub.s32 %v143, %v145
    %v147 = vrot.slane %v133, %v146
    %v148 = vcombine.high %v140, %v140
    %v149 = vcombine.high %v147, %v147
    %v151 = vunpack.c.l.s4 1983009808
    %v152 = vunpack.c.0.s8 %v151
    %v153 = vlaneseq
    %v154 = vshrl.u32 %v153, 7
    %v155 = vsub.s32 %v152, %v154
    %v156 = vrot.slane %v130, %v155
    %v157 = vcombine.high %v156, %v156
    %v164 = vpack.c.bf16 %v140, %v140
    %v165 = vpack.c.bf16 %v148, %v148
    %v166 = vpack.c.bf16 %v147, %v147
    %v167 = vpack.c.bf16 %v149, %v149
    %v168 = vpack.c.bf16 %v156, %v156
    %v169 = vpack.c.bf16 %v157, %v157
    %v170 = vld [vmem:[#allocation8] sm:$0xf]
    %v171 = vld [vmem:[#allocation8 + $0x4] sm:$0xf]
    %v172 = vld [vmem:[#allocation8 + $0x8] sm:$0xf]
    %v173 = vld [vmem:[#allocation8 + $0xc] sm:$0xf]
    %v174 = vld [vmem:[#allocation8 + $0x10] sm:$0xf]
    %v175 = vld [vmem:[#allocation8 + $0x14] sm:$0xf]
    %v176 = vld [vmem:[#allocation8 + $0x18] sm:$0xf]
    %v177 = vld [vmem:[#allocation8 + $0x1c] sm:$0xf]
    %v178 = vld [vmem:[#allocation8 + $0x20] sm:$0xf]
    %v179 = vld [vmem:[#allocation8 + $0x24] sm:$0xf]
    %v180 = vld [vmem:[#allocation8 + $0x28] sm:$0xf]
    %v181 = vld [vmem:[#allocation8 + $0x2c] sm:$0xf]
    %v182 = vld [vmem:[#allocation8 + $0x30] sm:$0xf]
    %v183 = vld [vmem:[#allocation8 + $0x34] sm:$0xf]
    %v184 = vld [vmem:[#allocation8 + $0x38] sm:$0xf]
    %v185 = vld [vmem:[#allocation8 + $0x3c] sm:$0xf]
    %v186 = vld [vmem:[#allocation8 + $0x40] sm:$0xf]
    %v187 = vld [vmem:[#allocation8 + $0x44] sm:$0xf]
    %v188 = vld [vmem:[#allocation8 + $0x48] sm:$0xf]
    %v189 = vld [vmem:[#allocation8 + $0x4c] sm:$0xf]
    %v190 = vld [vmem:[#allocation8 + $0x50] sm:$0xf]
    %v191 = vld [vmem:[#allocation8 + $0x54] sm:$0xf]
    %v192 = vld [vmem:[#allocation8 + $0x58] sm:$0xf]
    %v193 = vld [vmem:[#allocation8 + $0x5c] sm:$0xf]
    %v194 = vld [vmem:[#allocation8 + $0x60] sm:$0xf]
    %v195 = vld [vmem:[#allocation8 + $0x64] sm:$0xf]
    %v196 = vld [vmem:[#allocation8 + $0x68] sm:$0xf]
    %v197 = vld [vmem:[#allocation8 + $0x6c] sm:$0xf]
    %v198 = vld [vmem:[#allocation8 + $0x70] sm:$0xf]
    %v199 = vld [vmem:[#allocation8 + $0x74] sm:$0xf]
    %v200 = vld [vmem:[#allocation8 + $0x78] sm:$0xf]
    %v201 = vld [vmem:[#allocation8 + $0x7c] sm:$0xf]
    %v202 = vld [vmem:[#allocation8 + $0x80] sm:$0xf]
    %v203 = vld [vmem:[#allocation8 + $0x84] sm:$0xf]
    %v204 = vld [vmem:[#allocation8 + $0x88] sm:$0xf]
    %v205 = vld [vmem:[#allocation8 + $0x8c] sm:$0xf]
    %v206 = vld [vmem:[#allocation8 + $0x90] sm:$0xf]
    %v207 = vld [vmem:[#allocation8 + $0x94] sm:$0xf]
    %v208 = vld [vmem:[#allocation8 + $0x98] sm:$0xf]
    %v209 = vld [vmem:[#allocation8 + $0x9c] sm:$0xf]
    %v210 = vld [vmem:[#allocation8 + $0xa0] sm:$0xf]
    %v211 = vld [vmem:[#allocation8 + $0xa4] sm:$0xf]
    %v212 = vld [vmem:[#allocation8 + $0xa8] sm:$0xf]
    %v213 = vld [vmem:[#allocation8 + $0xac] sm:$0xf]
    %v214 = vld [vmem:[#allocation8 + $0xb0] sm:$0xf]
    %v215 = vld [vmem:[#allocation8 + $0xb4] sm:$0xf]
    %v216 = vld [vmem:[#allocation8 + $0xb8] sm:$0xf]
    %v217 = vld [vmem:[#allocation8 + $0xbc] sm:$0xf]
    %v218 = vld [vmem:[#allocation8 + $0xc0] sm:$0xf]
    %v219 = vld [vmem:[#allocation8 + $0xc4] sm:$0xf]
    %v220 = vld [vmem:[#allocation8 + $0xc8] sm:$0xf]
    %v221 = vld [vmem:[#allocation8 + $0xcc] sm:$0xf]
    %v222 = vld [vmem:[#allocation8 + $0xd0] sm:$0xf]
    %v223 = vld [vmem:[#allocation8 + $0xd4] sm:$0xf]
    %v224 = vld [vmem:[#allocation8 + $0xd8] sm:$0xf]
    %v225 = vld [vmem:[#allocation8 + $0xdc] sm:$0xf]
    %v226 = vld [vmem:[#allocation8 + $0xe0] sm:$0xf]
    %v227 = vld [vmem:[#allocation8 + $0xe4] sm:$0xf]
    %v228 = vld [vmem:[#allocation8 + $0xe8] sm:$0xf]
    %v229 = vld [vmem:[#allocation8 + $0xec] sm:$0xf]
    %v230 = vld [vmem:[#allocation8 + $0xf0] sm:$0xf]
    %v231 = vld [vmem:[#allocation8 + $0xf4] sm:$0xf]
    %v232 = vld [vmem:[#allocation8 + $0xf8] sm:$0xf]
    %v233 = vld [vmem:[#allocation8 + $0xfc] sm:$0xf]
    %v234 = vld [vmem:[#allocation8 + $0x100] sm:$0xf]
    %v235 = vld [vmem:[#allocation8 + $0x104] sm:$0xf]
    %v236 = vld [vmem:[#allocation8 + $0x108] sm:$0xf]
    %v237 = vld [vmem:[#allocation8 + $0x10c] sm:$0xf]
    %v238 = vld [vmem:[#allocation8 + $0x110] sm:$0xf]
    %v239 = vld [vmem:[#allocation8 + $0x114] sm:$0xf]
    %v240 = vld [vmem:[#allocation8 + $0x118] sm:$0xf]
    %v241 = vld [vmem:[#allocation8 + $0x11c] sm:$0xf]
    %v242 = vld [vmem:[#allocation8 + $0x120] sm:$0xf]
    %v243 = vld [vmem:[#allocation8 + $0x124] sm:$0xf]
    %v244 = vld [vmem:[#allocation8 + $0x128] sm:$0xf]
    %v245 = vld [vmem:[#allocation8 + $0x12c] sm:$0xf]
    %v246 = vld [vmem:[#allocation8 + $0x130] sm:$0xf]
    %v247 = vld [vmem:[#allocation8 + $0x134] sm:$0xf]
    %v248 = vld [vmem:[#allocation8 + $0x138] sm:$0xf]
    %v249 = vld [vmem:[#allocation8 + $0x13c] sm:$0xf]
    %v250 = vld [vmem:[#allocation8 + $0x140] sm:$0xf]
    %v251 = vld [vmem:[#allocation8 + $0x144] sm:$0xf]
    %v252 = vld [vmem:[#allocation8 + $0x148] sm:$0xf]
    %v253 = vld [vmem:[#allocation8 + $0x14c] sm:$0xf]
    %v254 = vld [vmem:[#allocation8 + $0x150] sm:$0xf]
    %v255 = vld [vmem:[#allocation8 + $0x154] sm:$0xf]
    %v256 = vld [vmem:[#allocation8 + $0x158] sm:$0xf]
    %v257 = vld [vmem:[#allocation8 + $0x15c] sm:$0xf]
    %v258 = vld [vmem:[#allocation8 + $0x160] sm:$0xf]
    %v259 = vld [vmem:[#allocation8 + $0x164] sm:$0xf]
    %v260 = vld [vmem:[#allocation8 + $0x168] sm:$0xf]
    %v261 = vld [vmem:[#allocation8 + $0x16c] sm:$0xf]
    %v262 = vld [vmem:[#allocation8 + $0x170] sm:$0xf]
    %v263 = vld [vmem:[#allocation8 + $0x174] sm:$0xf]
    %v264 = vld [vmem:[#allocation8 + $0x178] sm:$0xf]
    %v265 = vld [vmem:[#allocation8 + $0x17c] sm:$0xf]
    %v266 = vld [vmem:[%s4] sm:$0x1]
    %v268 = vlaneseq
    %v269 = vshrl.u32 %v268, 7
    %v270 = vsub.s32 0, %v269
    %v271 = vrot.slane %v266, %v270
    %v369 = vunpack.c.l.b16 %v170
    %v370 = vunpack.c.l.b16 %v171
    %v371 = vunpack.c.l.b16 %v172
    %v372 = vunpack.c.l.b16 %v173
    %v373 = vunpack.c.l.b16 %v174
    %v374 = vunpack.c.l.b16 %v175
    %v375 = vunpack.c.l.b16 %v176
    %v376 = vunpack.c.l.b16 %v177
    %v377 = vunpack.c.l.b16 %v178
    %v378 = vunpack.c.l.b16 %v179
    %v379 = vunpack.c.l.b16 %v180
    %v380 = vunpack.c.l.b16 %v181
    %v381 = vunpack.c.l.b16 %v182
    %v382 = vunpack.c.l.b16 %v183
    %v383 = vunpack.c.l.b16 %v184
    %v384 = vunpack.c.l.b16 %v185
    %v385 = vunpack.c.l.b16 %v186
    %v386 = vunpack.c.l.b16 %v187
    %v387 = vunpack.c.l.b16 %v188
    %v388 = vunpack.c.l.b16 %v189
    %v389 = vunpack.c.l.b16 %v190
    %v390 = vunpack.c.l.b16 %v191
    %v391 = vunpack.c.l.b16 %v192
    %v392 = vunpack.c.l.b16 %v193
    %v393 = vunpack.c.l.b16 %v194
    %v394 = vunpack.c.l.b16 %v195
    %v395 = vunpack.c.l.b16 %v196
    %v396 = vunpack.c.l.b16 %v197
    %v397 = vunpack.c.l.b16 %v198
    %v398 = vunpack.c.l.b16 %v199
    %v399 = vunpack.c.l.b16 %v200
    %v400 = vunpack.c.l.b16 %v201
    %v401 = vunpack.c.l.b16 %v202
    %v402 = vunpack.c.l.b16 %v203
    %v403 = vunpack.c.l.b16 %v204
    %v404 = vunpack.c.l.b16 %v205
    %v405 = vunpack.c.l.b16 %v206
    %v406 = vunpack.c.l.b16 %v207
    %v407 = vunpack.c.l.b16 %v208
    %v408 = vunpack.c.l.b16 %v209
    %v409 = vunpack.c.l.b16 %v210
    %v410 = vunpack.c.l.b16 %v211
    %v411 = vunpack.c.l.b16 %v212
    %v412 = vunpack.c.l.b16 %v213
    %v413 = vunpack.c.l.b16 %v214
    %v414 = vunpack.c.l.b16 %v215
    %v415 = vunpack.c.l.b16 %v216
    %v416 = vunpack.c.l.b16 %v217
    %v417 = vunpack.c.l.b16 %v218
    %v418 = vunpack.c.l.b16 %v219
    %v419 = vunpack.c.l.b16 %v220
    %v420 = vunpack.c.l.b16 %v221
    %v421 = vunpack.c.l.b16 %v222
    %v422 = vunpack.c.l.b16 %v223
    %v423 = vunpack.c.l.b16 %v224
    %v424 = vunpack.c.l.b16 %v225
    %v425 = vunpack.c.l.b16 %v226
    %v426 = vunpack.c.l.b16 %v227
    %v427 = vunpack.c.l.b16 %v228
    %v428 = vunpack.c.l.b16 %v229
    %v429 = vunpack.c.l.b16 %v230
    %v430 = vunpack.c.l.b16 %v231
    %v431 = vunpack.c.l.b16 %v232
    %v432 = vunpack.c.l.b16 %v233
    %v433 = vunpack.c.l.b16 %v234
    %v434 = vunpack.c.l.b16 %v235
    %v435 = vunpack.c.l.b16 %v236
    %v436 = vunpack.c.l.b16 %v237
    %v437 = vunpack.c.l.b16 %v238
    %v438 = vunpack.c.l.b16 %v239
    %v439 = vunpack.c.l.b16 %v240
    %v440 = vunpack.c.l.b16 %v241
    %v441 = vunpack.c.l.b16 %v242
    %v442 = vunpack.c.l.b16 %v243
    %v443 = vunpack.c.l.b16 %v244
    %v444 = vunpack.c.l.b16 %v245
    %v445 = vunpack.c.l.b16 %v246
    %v446 = vunpack.c.l.b16 %v247
    %v447 = vunpack.c.l.b16 %v248
    %v448 = vunpack.c.l.b16 %v249
    %v449 = vunpack.c.l.b16 %v250
    %v450 = vunpack.c.l.b16 %v251
    %v451 = vunpack.c.l.b16 %v252
    %v452 = vunpack.c.l.b16 %v253
    %v453 = vunpack.c.l.b16 %v254
    %v454 = vunpack.c.l.b16 %v255
    %v455 = vunpack.c.l.b16 %v256
    %v456 = vunpack.c.l.b16 %v257
    %v457 = vunpack.c.l.b16 %v258
    %v458 = vunpack.c.l.b16 %v259
    %v459 = vunpack.c.l.b16 %v260
    %v460 = vunpack.c.l.b16 %v261
    %v461 = vunpack.c.l.b16 %v262
    %v462 = vunpack.c.l.b16 %v263
    %v463 = vunpack.c.l.b16 %v264
    %v464 = vunpack.c.l.b16 %v265
    %v465 = vpack.c.b16 %v370, %v369
    %v466 = vpack.c.b16 %v372, %v371
    %v467 = vpack.c.b16 %v374, %v373
    %v468 = vpack.c.b16 %v376, %v375
    %v469 = vpack.c.b16 %v378, %v377
    %v470 = vpack.c.b16 %v380, %v379
    %v471 = vpack.c.b16 %v382, %v381
    %v472 = vpack.c.b16 %v384, %v383
    %v473 = vpack.c.b16 %v386, %v385
    %v474 = vpack.c.b16 %v388, %v387
    %v475 = vpack.c.b16 %v390, %v389
    %v476 = vpack.c.b16 %v392, %v391
    %v477 = vpack.c.b16 %v394, %v393
    %v478 = vpack.c.b16 %v396, %v395
    %v479 = vpack.c.b16 %v398, %v397
    %v480 = vpack.c.b16 %v400, %v399
    %v481 = vpack.c.b16 %v402, %v401
    %v482 = vpack.c.b16 %v404, %v403
    %v483 = vpack.c.b16 %v406, %v405
    %v484 = vpack.c.b16 %v408, %v407
    %v485 = vpack.c.b16 %v410, %v409
    %v486 = vpack.c.b16 %v412, %v411
    %v487 = vpack.c.b16 %v414, %v413
    %v488 = vpack.c.b16 %v416, %v415
    %v489 = vpack.c.b16 %v418, %v417
    %v490 = vpack.c.b16 %v420, %v419
    %v491 = vpack.c.b16 %v422, %v421
    %v492 = vpack.c.b16 %v424, %v423
    %v493 = vpack.c.b16 %v426, %v425
    %v494 = vpack.c.b16 %v428, %v427
    %v495 = vpack.c.b16 %v430, %v429
    %v496 = vpack.c.b16 %v432, %v431
    %v497 = vpack.c.b16 %v434, %v433
    %v498 = vpack.c.b16 %v436, %v435
    %v499 = vpack.c.b16 %v438, %v437
    %v500 = vpack.c.b16 %v440, %v439
    %v501 = vpack.c.b16 %v442, %v441
    %v502 = vpack.c.b16 %v444, %v443
    %v503 = vpack.c.b16 %v446, %v445
    %v504 = vpack.c.b16 %v448, %v447
    %v505 = vpack.c.b16 %v450, %v449
    %v506 = vpack.c.b16 %v452, %v451
    %v507 = vpack.c.b16 %v454, %v453
    %v508 = vpack.c.b16 %v456, %v455
    %v509 = vpack.c.b16 %v458, %v457
    %v510 = vpack.c.b16 %v460, %v459
    %v511 = vpack.c.b16 %v462, %v461
    %v512 = vpack.c.b16 %v464, %v463
    %561 = vmatprep.subr.bf16.mxu0 0
    %562 = vmatpush1.bf16.msra.mxu0 %v472
    %563 = vmatprep.subr.bf16.mxu0 0
    %564 = vmatpush1.bf16.msra.mxu0 %v471
    %565 = vmatprep.subr.bf16.mxu0 0
    %566 = vmatpush1.bf16.msra.mxu0 %v470
    %567 = vmatprep.subr.bf16.mxu0 0
    %568 = vmatpush1.bf16.msra.mxu0 %v469
    %569 = vmatprep.subr.bf16.mxu0 0
    %570 = vmatpush1.bf16.msra.mxu0 %v468
    %571 = vmatprep.subr.bf16.mxu0 0
    %572 = vmatpush1.bf16.msra.mxu0 %v467
    %573 = vmatprep.subr.bf16.mxu0 0
    %574 = vmatpush1.bf16.msra.mxu0 %v466
    %575 = vmatprep.subr.bf16.mxu0 0
    %576 = vmatpush1.bf16.msra.mxu0 %v465
    %577 = vmatprep.subr.bf16.mxu0 0
    %578 = vmatpush2.bf16.msra.mxu0 %v480
    %579 = vmatprep.subr.bf16.mxu0 0
    %580 = vmatpush2.bf16.msra.mxu0 %v479
    %581 = vmatprep.subr.bf16.mxu0 0
    %582 = vmatpush2.bf16.msra.mxu0 %v478
    %583 = vmatprep.subr.bf16.mxu0 0
    %584 = vmatpush2.bf16.msra.mxu0 %v477
    %585 = vmatprep.subr.bf16.mxu0 0
    %586 = vmatpush2.bf16.msra.mxu0 %v476
    %587 = vmatprep.subr.bf16.mxu0 0
    %588 = vmatpush2.bf16.msra.mxu0 %v475
    %589 = vmatprep.subr.bf16.mxu0 0
    %590 = vmatpush2.bf16.msra.mxu0 %v474
    %591 = vmatprep.subr.bf16.mxu0 0
    %592 = vmatpush2.bf16.msra.mxu0 %v473
    %593 = vmatprep.mubr.bf16.mxu0 %v165
    %594 = vmatmul.mubr.bf16.gmra.mxu0 %v164
    %v595 = vpop.f32.mrf.mxu0
    %v596 = vadd.f32 %v271, %v595
    %v597 = vpop.f32.mrf.mxu0
    %v598 = vpop.f32.mrf.mxu0
    %v599 = vpop.f32.mrf.mxu0
    %600 = vdwg.mxu0
    %601 = vmatprep.subr.bf16.mxu0 0
    %602 = vmatpush1.bf16.msra.mxu0 %v488
    %603 = vmatprep.subr.bf16.mxu0 0
    %604 = vmatpush1.bf16.msra.mxu0 %v487
    %605 = vmatprep.subr.bf16.mxu0 0
    %606 = vmatpush1.bf16.msra.mxu0 %v486
    %607 = vmatprep.subr.bf16.mxu0 0
    %608 = vmatpush1.bf16.msra.mxu0 %v485
    %609 = vmatprep.subr.bf16.mxu0 0
    %610 = vmatpush1.bf16.msra.mxu0 %v484
    %611 = vmatprep.subr.bf16.mxu0 0
    %612 = vmatpush1.bf16.msra.mxu0 %v483
    %613 = vmatprep.subr.bf16.mxu0 0
    %614 = vmatpush1.bf16.msra.mxu0 %v482
    %615 = vmatprep.subr.bf16.mxu0 0
    %616 = vmatpush1.bf16.msra.mxu0 %v481
    %617 = vmatprep.subr.bf16.mxu0 0
    %618 = vmatpush2.bf16.msra.mxu0 %v496
    %619 = vmatprep.subr.bf16.mxu0 0
    %620 = vmatpush2.bf16.msra.mxu0 %v495
    %621 = vmatprep.subr.bf16.mxu0 0
    %622 = vmatpush2.bf16.msra.mxu0 %v494
    %623 = vmatprep.subr.bf16.mxu0 0
    %624 = vmatpush2.bf16.msra.mxu0 %v493
    %625 = vmatprep.subr.bf16.mxu0 0
    %626 = vmatpush2.bf16.msra.mxu0 %v492
    %627 = vmatprep.subr.bf16.mxu0 0
    %628 = vmatpush2.bf16.msra.mxu0 %v491
    %629 = vmatprep.subr.bf16.mxu0 0
    %630 = vmatpush2.bf16.msra.mxu0 %v490
    %631 = vmatprep.subr.bf16.mxu0 0
    %632 = vmatpush2.bf16.msra.mxu0 %v489
    %633 = vmatprep.mubr.bf16.mxu0 %v167
    %634 = vmatmul.mubr.bf16.gmra.mxu0 %v166
    %v635 = vpop.f32.mrf.mxu0
    %v636 = vadd.f32 %v596, %v635
    %v637 = vpop.f32.mrf.mxu0
    %v638 = vpop.f32.mrf.mxu0
    %v639 = vpop.f32.mrf.mxu0
    %640 = vdwg.mxu0
    %641 = vmatprep.subr.bf16.mxu0 0
    %642 = vmatpush1.bf16.msra.mxu0 %v504
    %643 = vmatprep.subr.bf16.mxu0 0
    %644 = vmatpush1.bf16.msra.mxu0 %v503
    %645 = vmatprep.subr.bf16.mxu0 0
    %646 = vmatpush1.bf16.msra.mxu0 %v502
    %647 = vmatprep.subr.bf16.mxu0 0
    %648 = vmatpush1.bf16.msra.mxu0 %v501
    %649 = vmatprep.subr.bf16.mxu0 0
    %650 = vmatpush1.bf16.msra.mxu0 %v500
    %651 = vmatprep.subr.bf16.mxu0 0
    %652 = vmatpush1.bf16.msra.mxu0 %v499
    %653 = vmatprep.subr.bf16.mxu0 0
    %654 = vmatpush1.bf16.msra.mxu0 %v498
    %655 = vmatprep.subr.bf16.mxu0 0
    %656 = vmatpush1.bf16.msra.mxu0 %v497
    %657 = vmatprep.subr.bf16.mxu0 0
    %658 = vmatpush2.bf16.msra.mxu0 %v512
    %659 = vmatprep.subr.bf16.mxu0 0
    %660 = vmatpush2.bf16.msra.mxu0 %v511
    %661 = vmatprep.subr.bf16.mxu0 0
    %662 = vmatpush2.bf16.msra.mxu0 %v510
    %663 = vmatprep.subr.bf16.mxu0 0
    %664 = vmatpush2.bf16.msra.mxu0 %v509
    %665 = vmatprep.subr.bf16.mxu0 0
    %666 = vmatpush2.bf16.msra.mxu0 %v508
    %667 = vmatprep.subr.bf16.mxu0 0
    %668 = vmatpush2.bf16.msra.mxu0 %v507
    %669 = vmatprep.subr.bf16.mxu0 0
    %670 = vmatpush2.bf16.msra.mxu0 %v506
    %671 = vmatprep.subr.bf16.mxu0 0
    %672 = vmatpush2.bf16.msra.mxu0 %v505
    %673 = vmatprep.mubr.bf16.mxu0 %v169
    %674 = vmatmul.mubr.bf16.gmra.mxu0 %v168
    %v675 = vpop.f32.mrf.mxu0
    %v676 = vadd.f32 %v636, %v675
    %v677 = vpop.f32.mrf.mxu0
    %v678 = vpop.f32.mrf.mxu0
    %v679 = vpop.f32.mrf.mxu0
    %680 = vdwg.mxu0
    %681 = vst [vmem:[#allocation10] sm:$0x3] %v676
    // Predicated region
    $region38: #{tpu_custom_call.1} parent=1 // pred_check
      _
    $region39: #{tpu_custom_call.1} parent=1 // pred_check_branch
      %683 = sbr.rel (0) target = $region41
    $region40: #{tpu_custom_call.1} parent=1 // pred_region
      %s685 = ssub.s32 32, 32
      %686 = vsyncadd [#allocation4], %s685
      %s688 = sshll.u32 [#allocation10], 4
      %s689 = int_to_ptr.vmem [resolvable:$true] %s688
      %691 = dma.vmem_to_hbm [thread:$0]  %s689, 32, %s5, [#allocation4]
    $region41: #{tpu_custom_call.1} parent=1 // pred_fallthru
      _
    // Predicated region
    $region42: #{tpu_custom_call.1} parent=1 // pred_check
      _
    $region43: #{tpu_custom_call.1} parent=1 // pred_check_branch
      %693 = sbr.rel (0) target = $region45
    $region44: #{tpu_custom_call.1} parent=1 // pred_region
      %694 = dma.done [#allocation4], 32
    $region45: #{tpu_custom_call.1} parent=1 // pred_fallthru
      _
    %695 = vsyncpa [#allocation3], 1
    %696 = vsyncpa [#allocation6], 1
    %697 = vsyncpa [#allocation9], 1
    %698 = vsyncpa [#allocation4], 1

</llo_original>
